<compile_context>
chip_gen: v5e
topology: v5e:2x2
jax: 0.10.0
libtpu: 0.0.40
codegen_flags: <defaults>
</compile_context>

<pallas_src>
import functools

import jax
import jax.numpy as jnp
from jax.experimental import pallas as pl
from jax.experimental.pallas import tpu as pltpu

LANE = 128          # TPU lane width
SUB = 8             # TPU sublane count (f32)
VOCAB = 50
TYPE_VOCAB = 2
HIDDEN = 32


def _round_up(x, k):
    return -(-x // k) * k


# -----------------------------------------------------------------------------
# Fused Pallas kernel
# -----------------------------------------------------------------------------
def make_fused_editor_kernel(layer_meta):
    """layer_meta: static tuple of (ab_off, m_pad, gd_off, row_off) per editable matrix."""
    TN = (((0,), (0,)), ((), ()))   # contract the example axis of both operands (MXU)

    def kernel(emb_ref, pool_ref, encw_ref, encb_ref,
               wab_ref, bab_ref, wgd_ref, bgd_ref, grad_ref, out_ref):
        # (1) encoder dense + tanh on the X_Y_A hidden states: (B*S, H)
        enc = jnp.tanh(
            jnp.dot(emb_ref[...], encw_ref[...], preferred_element_type=jnp.float32)
            + encb_ref[...]
        )

        # (2) per-example mask-aware mean pool as one MXU matmul.  The block-diagonal
        #     pooling matrix (mask rows, 1/denominator folded in) is built in JAX glue.
        c = jnp.dot(pool_ref[...], enc, preferred_element_type=jnp.float32)      # (B, H)

        # (3) hypernetwork projections for ALL layers at once (two wide matmuls)
        proj_ab = (jnp.dot(c, wab_ref[...], preferred_element_type=jnp.float32)
                   + bab_ref[...])                                                # (B, PAB)
        proj_gd = (jnp.dot(c, wgd_ref[...], preferred_element_type=jnp.float32)
                   + bgd_ref[...])                                                # (B, PGD)

        # (4) per layer: gated rank-1 delta, summed over the B edit examples by the MXU:
        #     sum_b sigma(eta_b)*(alpha_b (x) gamma_b (.) gradW + beta_b (x) delta_b)
        #       = (Alpha^T @ (gate*Gamma)) (.) gradW  +  Beta^T @ (gate*Delta)
        for ab_off, m_pad, gd_off, row_off in layer_meta:
            alpha = proj_ab[:, ab_off:ab_off + m_pad]                        # (B, m_pad)
            beta = proj_ab[:, ab_off + m_pad:ab_off + 2 * m_pad]             # (B, m_pad)
            gate = jax.nn.sigmoid(
                proj_ab[:, ab_off + 2 * m_pad:ab_off + 2 * m_pad + 1])       # (B, 1)
            g_row = gate * proj_gd[:, gd_off:gd_off + LANE]                  # (B, LANE)
            d_row = gate * proj_gd[:, gd_off + LANE:gd_off + 2 * LANE]       # (B, LANE)
            ag = jax.lax.dot_general(alpha, g_row, TN,
                                     preferred_element_type=jnp.float32)     # (m_pad, LANE)
            bd = jax.lax.dot_general(beta, d_row, TN,
                                     preferred_element_type=jnp.float32)     # (m_pad, LANE)
            out_ref[row_off:row_off + m_pad, :] = (
                ag * grad_ref[row_off:row_off + m_pad, :] + bd)

    return kernel


# -----------------------------------------------------------------------------
# Pallas wrapper (single no-grid pallas_call, whole-array VMEM residency)
# -----------------------------------------------------------------------------
def pallas_knowledge_editor(emb2d, poolmat, enc_w, enc_b, wab, bab, wgd, bgd,
                            grad_slab, layer_meta):
    Mtot, H = emb2d.shape
    B = poolmat.shape[0]
    M_rows = grad_slab.shape[0]
    PAB = wab.shape[1]
    PGD = wgd.shape[1]

    kernel = make_fused_editor_kernel(layer_meta)
    in_arrays = [emb2d, poolmat, enc_w, enc_b, wab, bab, wgd, bgd, grad_slab]
    vmem = pl.BlockSpec(memory_space=pltpu.MemorySpace.VMEM)

    flops = int(2 * Mtot * H * H + 2 * B * Mtot * H + 2 * B * H * (PAB + PGD)
                + sum(4 * B * m_pad * LANE + 2 * m_pad * LANE
                      for (_, m_pad, _, _) in layer_meta))
    transcendentals = int(Mtot * H + B * len(layer_meta))
    bytes_accessed = int(4 * (sum(a.size for a in in_arrays) + M_rows * LANE))

    return pl.pallas_call(
        kernel,
        out_shape=jax.ShapeDtypeStruct((M_rows, LANE), jnp.float32),
        in_specs=[vmem] * len(in_arrays),
        out_specs=vmem,
        cost_estimate=pl.CostEstimate(flops=flops,
                                      transcendentals=transcendentals,
                                      bytes_accessed=bytes_accessed),
    )(*in_arrays)


# -----------------------------------------------------------------------------
# Tiny synthetic "BERT" (glue) + deterministic parameter init
# -----------------------------------------------------------------------------
def init_params(key):
    ks = jax.random.split(key, 8)
    bert = {
        # "embed" params: excluded from hypernetworks (like the PyTorch module)
        "word_emb": 0.02 * jax.random.normal(ks[0], (VOCAB, HIDDEN), jnp.float32),
        "type_emb": 0.02 * jax.random.normal(ks[1], (TYPE_VOCAB, HIDDEN), jnp.float32),
        # editable weight matrices (non-bias, non-embed, non-LayerNorm)
        "enc_w": 0.1 * jax.random.normal(ks[2], (HIDDEN, HIDDEN), jnp.float32),
        "enc_b": jnp.zeros((HIDDEN,), jnp.float32),
        "cls_w": 0.1 * jax.random.normal(ks[3], (1, HIDDEN), jnp.float32),
        "cls_b": jnp.zeros((1,), jnp.float32),
    }
    layer_shapes = {
        "bert-encoder-dense-weight": ("enc_w", (HIDDEN, HIDDEN)),
        "classifier-weight": ("cls_w", (1, HIDDEN)),
    }
    # hypernetwork per editable (m, n) weight matrix: Wp:(H, 2m+2n+1), bp:(2m+2n+1,)
    # source column order: [alpha(m), gamma(n), beta(m), delta(n), eta(1)]
    hyper = {}
    for idx, (name, (_, (m, n))) in enumerate(layer_shapes.items()):
        P = 2 * m + 2 * n + 1
        kk = jax.random.split(ks[4 + idx], 2)
        hyper[name] = {
            "Wp": 0.1 * jax.random.normal(kk[0], (HIDDEN, P), jnp.float32),
            "bp": 0.01 * jax.random.normal(kk[1], (P,), jnp.float32),
        }
    return bert, hyper, layer_shapes


def pack_hyper_params(hyper, layer_shapes):
    """Pack every layer's Wp/bp into two concatenated projection matrices.

    - wab/bab: alpha/beta/eta slots of all layers, sublane(8)-aligned fields, total width
      padded to a multiple of 128 lanes (all layers share the block).
    - wgd/bgd: gamma/delta slots, 128-lane aligned per layer (2*128 lanes each).
    Returns packing metadata for the kernel (static ints) and the output slab layout.
    """
    H = HIDDEN
    ab_cursor, gd_cursor, row_cursor = 0, 0, 0
    meta, slab_meta, entries = [], [], []
    for name, (_gk, (m, n)) in layer_shapes.items():
        assert n <= LANE, (name, n)              # TODO(synk): widen slot for n > 128
        m_pad = _round_up(m, SUB)
        a_off = ab_cursor
        ab_cursor = _round_up(a_off + 2 * m_pad + 1, SUB)
        g_off = gd_cursor
        gd_cursor += 2 * LANE
        r_off = row_cursor
        row_cursor += m_pad
        meta.append((a_off, m_pad, g_off, r_off))
        slab_meta.append((r_off, m, n))
        entries.append((name, a_off, m, m_pad, g_off, n))

    PAB = _round_up(ab_cursor, LANE)
    PGD = gd_cursor
    M_rows = row_cursor

    wab = jnp.zeros((H, PAB), jnp.float32)
    bab = jnp.zeros((PAB,), jnp.float32)
    wgd = jnp.zeros((H, PGD), jnp.float32)
    bgd = jnp.zeros((PGD,), jnp.float32)
    for name, a_off, m, m_pad, g_off, n in entries:
        Wp, bp = hyper[name]["Wp"], hyper[name]["bp"]
        # source column order: alpha(m), gamma(n), beta(m), delta(n), eta(1)
        wab = wab.at[:, a_off:a_off + m].set(Wp[:, 0:m])                              # alpha
        wab = wab.at[:, a_off + m_pad:a_off + m_pad + m].set(Wp[:, m + n:2 * m + n])  # beta
        wab = wab.at[:, a_off + 2 * m_pad:a_off + 2 * m_pad + 1].set(
            Wp[:, 2 * m + 2 * n:])                                                    # eta
        bab = bab.at[a_off:a_off + m].set(bp[0:m])
        bab = bab.at[a_off + m_pad:a_off + m_pad + m].set(bp[m + n:2 * m + n])
        bab = bab.at[a_off + 2 * m_pad:a_off + 2 * m_pad + 1].set(bp[2 * m + 2 * n:])
        wgd = wgd.at[:, g_off:g_off + n].set(Wp[:, m:m + n])                          # gamma
        wgd = wgd.at[:, g_off + LANE:g_off + LANE + n].set(
            Wp[:, 2 * m + n:2 * m + 2 * n])                                           # delta
        bgd = bgd.at[g_off:g_off + n].set(bp[m:m + n])
        bgd = bgd.at[g_off + LANE:g_off + LANE + n].set(bp[2 * m + n:2 * m + 2 * n])

    return (wab, bab.reshape(1, -1), wgd, bgd.reshape(1, -1),
            tuple(meta), tuple(slab_meta), M_rows)


def bert_forward_plain(params, ids, type_ids, mask):
    emb = params["word_emb"][ids] + params["type_emb"][type_ids]          # (B,S,H)
    h = jnp.tanh(emb @ params["enc_w"] + params["enc_b"])                 # (B,S,H)
    m = mask[..., None].astype(jnp.float32)
    pooled = (h * m).sum(axis=1) / jnp.clip(m.sum(axis=1), 1.0)           # (B,H)
    logits = pooled @ params["cls_w"].T + params["cls_b"]                 # (B,1)
    return logits[:, 0]                                                   # (B,)


def bce_with_logits(logits, targets):
    # same math as torch.nn.BCEWithLogitsLoss (mean reduction), numerically stable
    z, y = logits, targets
    return jnp.mean(jnp.maximum(z, 0.0) - z * y + jnp.log1p(jnp.exp(-jnp.abs(z))))


# -----------------------------------------------------------------------------
# KnowledgeEditor forward
# -----------------------------------------------------------------------------
def knowledge_editor_forward(bert_params, hyper_packed, layer_shapes,
                             X_ids, X_type_ids, X_mask, A,
                             XYA_ids, XYA_type_ids, XYA_mask):
    wab, bab, wgd, bgd, layer_meta, slab_meta, m_rows = hyper_packed

    # (1) bert.zero_grad(); BCEWithLogits(bert(X...), A).backward()  -> gradW per layer
    editable = {gk: bert_params[gk] for _n, (gk, _s) in layer_shapes.items()}

    def loss_fn(ed):
        p = {**bert_params, **ed}
        logits = bert_forward_plain(p, X_ids, X_type_ids, X_mask)
        return bce_with_logits(logits, A)

    grads = jax.grad(loss_fn)(editable)      # glue: autodiff (no Pallas equivalent)

    # (2) encoded_input = bert.bert(X_Y_A...)[0]  and  (3) all hypernetworks,
    #     all inside ONE fused Pallas kernel.
    emb = bert_params["word_emb"][XYA_ids] + bert_params["type_emb"][XYA_type_ids]
    B, S, H = emb.shape
    emb2d = emb.reshape(B * S, H)                                         # stays 2-D

    # per-example mean-pool matrix: block diagonal, mask & 1/denominator folded in
    maskf = XYA_mask.astype(jnp.float32)                                  # (B, S)
    w = maskf / jnp.maximum(maskf.sum(axis=1, keepdims=True), 1.0)        # (B, S)
    poolmat = (jnp.eye(B, dtype=jnp.float32)[:, :, None]
               * w[None, :, :]).reshape(B, B * S)                         # (B, B*S)

    # pack every layer's gradW into one 8-aligned, lane-dense slab
    grad_slab = jnp.zeros((m_rows, LANE), jnp.float32)
    for (name, (gk, (m, n))), (r_off, m_, n_) in zip(layer_shapes.items(), slab_meta):
        g = grads[gk]
        assert g.shape == (m, n) == (m_, n_), (name, g.shape, (m, n))
        grad_slab = grad_slab.at[r_off:r_off + m, :n].set(g)

    delta_slab = pallas_knowledge_editor(
        emb2d, poolmat, bert_params["enc_w"], bert_params["enc_b"].reshape(1, H),
        wab, bab, wgd, bgd, grad_slab, layer_meta)

    # strip padding: one (m, n) delta per editable weight matrix
    h_outputs = {}
    for (name, (_gk, (m, n))), (r_off, _m, _n) in zip(layer_shapes.items(), slab_meta):
        h_outputs[name] = delta_slab[r_off:r_off + m, :n]
    return h_outputs


# -----------------------------------------------------------------------------
# main
# -----------------------------------------------------------------------------
if __name__ == "__main__":
    key = jax.random.PRNGKey(0)
    k_par, k1, k2, k3, k4 = jax.random.split(key, 5)

    bert_params, hyper_params, layer_shapes = init_params(k_par)
    hyper_packed = pack_hyper_params(hyper_params, layer_shapes)

    B, S, S2 = 2, 8, 12
    X_ids = jax.random.randint(k1, (B, S), 0, VOCAB, dtype=jnp.int32)
    X_type_ids = jnp.zeros((B, S), jnp.int32)
    X_mask = jnp.ones((B, S), jnp.int32)
    A = jax.random.bernoulli(k2, 0.5, (B,)).astype(jnp.float32)

    XYA_ids = jax.random.randint(k3, (B, S2), 0, VOCAB, dtype=jnp.int32)
    XYA_type_ids = jax.random.randint(k4, (B, S2), 0, TYPE_VOCAB, dtype=jnp.int32)
    XYA_mask = jnp.ones((B, S2), jnp.int32)

    fwd = jax.jit(functools.partial(knowledge_editor_forward,
                                    bert_params, hyper_packed, layer_shapes))
    h_outputs = fwd(X_ids, X_type_ids, X_mask, A, XYA_ids, XYA_type_ids, XYA_mask)

    for name, (_gk, (m, n)) in layer_shapes.items():
        out = jax.block_until_ready(h_outputs[name])
        assert out.shape == (m, n), (name, out.shape)
        assert bool(jnp.all(jnp.isfinite(out)))

    print("KERNEL_OK")
</pallas_src>

<mosaic_0001>
module attributes {stable_mosaic.version = 11 : i64} {
  func.func @kernel(%arg0: memref<24x32xf32, #tpu.memory_space<vmem>>, %arg1: memref<2x24xf32, #tpu.memory_space<vmem>>, %arg2: memref<32x32xf32, #tpu.memory_space<vmem>>, %arg3: memref<1x32xf32, #tpu.memory_space<vmem>>, %arg4: memref<32x128xf32, #tpu.memory_space<vmem>>, %arg5: memref<1x128xf32, #tpu.memory_space<vmem>>, %arg6: memref<32x512xf32, #tpu.memory_space<vmem>>, %arg7: memref<1x512xf32, #tpu.memory_space<vmem>>, %arg8: memref<40x128xf32, #tpu.memory_space<vmem>>, %arg9: memref<40x128xf32, #tpu.memory_space<vmem>>) attributes {dimension_semantics = [], scalar_prefetch = 0 : i64, scratch_operands = 0 : i64, tpu.core_type = #tpu.core_type<tc>} {
    %c0 = arith.constant 0 : index
    %c0_0 = arith.constant 0 : index
    %0 = vector.load %arg0[%c0, %c0_0] : memref<24x32xf32, #tpu.memory_space<vmem>>, vector<24x32xf32>
    %c0_1 = arith.constant 0 : index
    %c0_2 = arith.constant 0 : index
    %1 = vector.load %arg2[%c0_1, %c0_2] : memref<32x32xf32, #tpu.memory_space<vmem>>, vector<32x32xf32>
    %cst = arith.constant dense<0.000000e+00> : vector<24x32xf32>
    %2 = tpu.matmul %0, %1, %cst {dimension_numbers = #tpu.dot_dimension_numbers<[1], [0], [0], [1], [0, 0, 1, 1], [], []>} : vector<24x32xf32>, vector<32x32xf32>, vector<24x32xf32> -> vector<24x32xf32>
    %c0_3 = arith.constant 0 : index
    %c0_4 = arith.constant 0 : index
    %3 = vector.load %arg3[%c0_3, %c0_4] : memref<1x32xf32, #tpu.memory_space<vmem>>, vector<1x32xf32>
    %4 = vector.broadcast %3 : vector<1x32xf32> to vector<24x32xf32>
    %5 = arith.addf %2, %4 : vector<24x32xf32>
    %6 = math.tanh %5 : vector<24x32xf32>
    %c0_5 = arith.constant 0 : index
    %c0_6 = arith.constant 0 : index
    %7 = vector.load %arg1[%c0_5, %c0_6] : memref<2x24xf32, #tpu.memory_space<vmem>>, vector<2x24xf32>
    %cst_7 = arith.constant dense<0.000000e+00> : vector<2x32xf32>
    %8 = tpu.matmul %7, %6, %cst_7 {dimension_numbers = #tpu.dot_dimension_numbers<[1], [0], [0], [1], [0, 0, 1, 1], [], []>} : vector<2x24xf32>, vector<24x32xf32>, vector<2x32xf32> -> vector<2x32xf32>
    %c0_8 = arith.constant 0 : index
    %c0_9 = arith.constant 0 : index
    %9 = vector.load %arg4[%c0_8, %c0_9] : memref<32x128xf32, #tpu.memory_space<vmem>>, vector<32x128xf32>
    %cst_10 = arith.constant dense<0.000000e+00> : vector<2x128xf32>
    %10 = tpu.matmul %8, %9, %cst_10 {dimension_numbers = #tpu.dot_dimension_numbers<[1], [0], [0], [1], [0, 0, 1, 1], [], []>} : vector<2x32xf32>, vector<32x128xf32>, vector<2x128xf32> -> vector<2x128xf32>
    %c0_11 = arith.constant 0 : index
    %c0_12 = arith.constant 0 : index
    %11 = vector.load %arg5[%c0_11, %c0_12] : memref<1x128xf32, #tpu.memory_space<vmem>>, vector<1x128xf32>
    %12 = vector.broadcast %11 : vector<1x128xf32> to vector<2x128xf32>
    %13 = arith.addf %10, %12 : vector<2x128xf32>
    %c0_13 = arith.constant 0 : index
    %c0_14 = arith.constant 0 : index
    %14 = vector.load %arg6[%c0_13, %c0_14] : memref<32x512xf32, #tpu.memory_space<vmem>>, vector<32x512xf32>
    %cst_15 = arith.constant dense<0.000000e+00> : vector<2x512xf32>
    %15 = tpu.matmul %8, %14, %cst_15 {dimension_numbers = #tpu.dot_dimension_numbers<[1], [0], [0], [1], [0, 0, 1, 1], [], []>} : vector<2x32xf32>, vector<32x512xf32>, vector<2x512xf32> -> vector<2x512xf32>
    %c0_16 = arith.constant 0 : index
    %c0_17 = arith.constant 0 : index
    %16 = vector.load %arg7[%c0_16, %c0_17] : memref<1x512xf32, #tpu.memory_space<vmem>>, vector<1x512xf32>
    %17 = vector.broadcast %16 : vector<1x512xf32> to vector<2x512xf32>
    %18 = arith.addf %15, %17 : vector<2x512xf32>
    %19 = vector.extract_strided_slice %13 {offsets = [0, 0], sizes = [2, 32], strides = [1, 1]} : vector<2x128xf32> to vector<2x32xf32>
    %20 = vector.extract_strided_slice %13 {offsets = [0, 32], sizes = [2, 32], strides = [1, 1]} : vector<2x128xf32> to vector<2x32xf32>
    %21 = vector.extract_strided_slice %13 {offsets = [0, 64], sizes = [2, 1], strides = [1, 1]} : vector<2x128xf32> to vector<2x1xf32>
    %22 = arith.negf %21 : vector<2x1xf32>
    %23 = math.exp %22 : vector<2x1xf32>
    %cst_18 = arith.constant 1.000000e+00 : f32
    %24 = vector.broadcast %cst_18 : f32 to vector<2x1xf32>
    %25 = arith.addf %24, %23 : vector<2x1xf32>
    %26 = arith.divf %24, %25 : vector<2x1xf32>
    %27 = vector.extract_strided_slice %18 {offsets = [0, 0], sizes = [2, 128], strides = [1, 1]} : vector<2x512xf32> to vector<2x128xf32>
    %28 = vector.broadcast %26 : vector<2x1xf32> to vector<2x128xf32>
    %29 = arith.mulf %28, %27 : vector<2x128xf32>
    %30 = vector.extract_strided_slice %18 {offsets = [0, 128], sizes = [2, 128], strides = [1, 1]} : vector<2x512xf32> to vector<2x128xf32>
    %31 = vector.broadcast %26 : vector<2x1xf32> to vector<2x128xf32>
    %32 = arith.mulf %31, %30 : vector<2x128xf32>
    %cst_19 = arith.constant dense<0.000000e+00> : vector<32x128xf32>
    %33 = tpu.matmul %19, %29, %cst_19 {dimension_numbers = #tpu.dot_dimension_numbers<[0], [0], [1], [1], [0, 1, 1, 1], [], []>} : vector<2x32xf32>, vector<2x128xf32>, vector<32x128xf32> -> vector<32x128xf32>
    %cst_20 = arith.constant dense<0.000000e+00> : vector<32x128xf32>
    %34 = tpu.matmul %20, %32, %cst_20 {dimension_numbers = #tpu.dot_dimension_numbers<[0], [0], [1], [1], [0, 1, 1, 1], [], []>} : vector<2x32xf32>, vector<2x128xf32>, vector<32x128xf32> -> vector<32x128xf32>
    %c0_21 = arith.constant 0 : index
    %c0_22 = arith.constant 0 : index
    %35 = vector.load %arg8[%c0_21, %c0_22] : memref<40x128xf32, #tpu.memory_space<vmem>>, vector<32x128xf32>
    %36 = arith.mulf %33, %35 : vector<32x128xf32>
    %37 = arith.addf %36, %34 : vector<32x128xf32>
    %c0_23 = arith.constant 0 : index
    %c0_24 = arith.constant 0 : index
    %38 = vector.load %arg9[%c0_23, %c0_24] : memref<40x128xf32, #tpu.memory_space<vmem>>, vector<32x128xf32>
    tpu.vector_store %arg9[%c0_23, %c0_24], %37 {strides = array<i32>} : memref<40x128xf32, #tpu.memory_space<vmem>>, vector<32x128xf32>,
    %39 = vector.extract_strided_slice %13 {offsets = [0, 72], sizes = [2, 8], strides = [1, 1]} : vector<2x128xf32> to vector<2x8xf32>
    %40 = vector.extract_strided_slice %13 {offsets = [0, 80], sizes = [2, 8], strides = [1, 1]} : vector<2x128xf32> to vector<2x8xf32>
    %41 = vector.extract_strided_slice %13 {offsets = [0, 88], sizes = [2, 1], strides = [1, 1]} : vector<2x128xf32> to vector<2x1xf32>
    %42 = arith.negf %41 : vector<2x1xf32>
    %43 = math.exp %42 : vector<2x1xf32>
    %cst_25 = arith.constant 1.000000e+00 : f32
    %44 = vector.broadcast %cst_25 : f32 to vector<2x1xf32>
    %45 = arith.addf %44, %43 : vector<2x1xf32>
    %46 = arith.divf %44, %45 : vector<2x1xf32>
    %47 = vector.extract_strided_slice %18 {offsets = [0, 256], sizes = [2, 128], strides = [1, 1]} : vector<2x512xf32> to vector<2x128xf32>
    %48 = vector.broadcast %46 : vector<2x1xf32> to vector<2x128xf32>
    %49 = arith.mulf %48, %47 : vector<2x128xf32>
    %50 = vector.extract_strided_slice %18 {offsets = [0, 384], sizes = [2, 128], strides = [1, 1]} : vector<2x512xf32> to vector<2x128xf32>
    %51 = vector.broadcast %46 : vector<2x1xf32> to vector<2x128xf32>
    %52 = arith.mulf %51, %50 : vector<2x128xf32>
    %cst_26 = arith.constant dense<0.000000e+00> : vector<8x128xf32>
    %53 = tpu.matmul %39, %49, %cst_26 {dimension_numbers = #tpu.dot_dimension_numbers<[0], [0], [1], [1], [0, 1, 1, 1], [], []>} : vector<2x8xf32>, vector<2x128xf32>, vector<8x128xf32> -> vector<8x128xf32>
    %cst_27 = arith.constant dense<0.000000e+00> : vector<8x128xf32>
    %54 = tpu.matmul %40, %52, %cst_27 {dimension_numbers = #tpu.dot_dimension_numbers<[0], [0], [1], [1], [0, 1, 1, 1], [], []>} : vector<2x8xf32>, vector<2x128xf32>, vector<8x128xf32> -> vector<8x128xf32>
    %c32 = arith.constant 32 : index
    %c0_28 = arith.constant 0 : index
    %55 = vector.load %arg8[%c32, %c0_28] : memref<40x128xf32, #tpu.memory_space<vmem>>, vector<8x128xf32>
    %56 = arith.mulf %53, %55 : vector<8x128xf32>
    %57 = arith.addf %56, %54 : vector<8x128xf32>
    %c32_29 = arith.constant 32 : index
    %c0_30 = arith.constant 0 : index
    %58 = vector.load %arg9[%c32_29, %c0_30] : memref<40x128xf32, #tpu.memory_space<vmem>>, vector<8x128xf32>
    tpu.vector_store %arg9[%c32_29, %c0_30], %57 {strides = array<i32>} : memref<40x128xf32, #tpu.memory_space<vmem>>, vector<8x128xf32>,
    return
  }
}

</mosaic_0001>

<llo_original>
// kernel: knowledge_editor_forward.1
$region0: #{knowledge_editor_forward.1}
  #allocation0 [shape = 'u32[]', space=smem, size = 0x4, offset = 0x4, fixed_abs, tag = 'smem constant byte address 0x4 - core index']
  #allocation1 [shape = 'u32[72,128]{1,0:T(1,128)}', space=vmem, size = 0x9000, scoped, tag = 'internal scratch']
  %s0 = inlined_call_operand.vmem [shape: f32[24,32], index: 0, kind: input, shape index: {}]
  %s1 = inlined_call_operand.vmem [shape: f32[2,24], index: 1, kind: input, shape index: {}]
  %s2 = inlined_call_operand.vmem [shape: f32[32,32], index: 2, kind: input, shape index: {}]
  %s3 = inlined_call_operand.vmem [shape: f32[1,32], index: 3, kind: input, shape index: {}]
  %s4 = inlined_call_operand.vmem [shape: f32[32,128], index: 4, kind: input, shape index: {}]
  %s5 = inlined_call_operand.vmem [shape: f32[1,128], index: 5, kind: input, shape index: {}]
  %s6 = inlined_call_operand.vmem [shape: f32[32,512], index: 6, kind: input, shape index: {}]
  %s7 = inlined_call_operand.vmem [shape: f32[1,512], index: 7, kind: input, shape index: {}]
  %s8 = inlined_call_operand.vmem [shape: f32[40,128], index: 8, kind: input, shape index: {}]
  %s9 = inlined_call_operand.vmem [shape: f32[40,128], index: 9, kind: output, shape index: {}]
  %s10 = sld [smem:[#allocation0]]
  $region46: #{knowledge_editor_forward.1} parent=0
    _
  %s12 = ssub.s32 1, %s10
  %s13 = scalar_select 0, %s12, %s10
  // Predicated region
  $region2: #{knowledge_editor_forward.1} parent=0 // pred_check
    _
  $region3: #{knowledge_editor_forward.1} parent=0 // pred_check_branch
    %15 = sbr.rel (0) target = $region5
  $region4: #{knowledge_editor_forward.1} parent=0 // pred_region
    _
  $region5: #{knowledge_editor_forward.1} parent=0 // pred_fallthru
    _
  // Predicated region
  $region6: #{knowledge_editor_forward.1} parent=0 // pred_check
    _
  $region7: #{knowledge_editor_forward.1} parent=0 // pred_check_branch
    %17 = sbr.rel (0) target = $region9
  $region8: #{knowledge_editor_forward.1} parent=0 // pred_region
    _
  $region9: #{knowledge_editor_forward.1} parent=0 // pred_fallthru
    _
  // Predicated region
  $region10: #{knowledge_editor_forward.1} parent=0 // pred_check
    _
  $region11: #{knowledge_editor_forward.1} parent=0 // pred_check_branch
    %19 = sbr.rel (0) target = $region13
  $region12: #{knowledge_editor_forward.1} parent=0 // pred_region
    _
  $region13: #{knowledge_editor_forward.1} parent=0 // pred_fallthru
    _
  // Predicated region
  $region14: #{knowledge_editor_forward.1} parent=0 // pred_check
    _
  $region15: #{knowledge_editor_forward.1} parent=0 // pred_check_branch
    %21 = sbr.rel (0) target = $region17
  $region16: #{knowledge_editor_forward.1} parent=0 // pred_region
    _
  $region17: #{knowledge_editor_forward.1} parent=0 // pred_fallthru
    _
  // Predicated region
  $region18: #{knowledge_editor_forward.1} parent=0 // pred_check
    _
  $region19: #{knowledge_editor_forward.1} parent=0 // pred_check_branch
    %23 = sbr.rel (0) target = $region21
  $region20: #{knowledge_editor_forward.1} parent=0 // pred_region
    _
  $region21: #{knowledge_editor_forward.1} parent=0 // pred_fallthru
    _
  // Predicated region
  $region22: #{knowledge_editor_forward.1} parent=0 // pred_check
    _
  $region23: #{knowledge_editor_forward.1} parent=0 // pred_check_branch
    %25 = sbr.rel (0) target = $region25
  $region24: #{knowledge_editor_forward.1} parent=0 // pred_region
    _
  $region25: #{knowledge_editor_forward.1} parent=0 // pred_fallthru
    _
  // Predicated region
  $region26: #{knowledge_editor_forward.1} parent=0 // pred_check
    _
  $region27: #{knowledge_editor_forward.1} parent=0 // pred_check_branch
    %27 = sbr.rel (0) target = $region29
  $region28: #{knowledge_editor_forward.1} parent=0 // pred_region
    _
  $region29: #{knowledge_editor_forward.1} parent=0 // pred_fallthru
    _
  // Predicated region
  $region30: #{knowledge_editor_forward.1} parent=0 // pred_check
    _
  $region31: #{knowledge_editor_forward.1} parent=0 // pred_check_branch
    %29 = sbr.rel (0) target = $region33
  $region32: #{knowledge_editor_forward.1} parent=0 // pred_region
    _
  $region33: #{knowledge_editor_forward.1} parent=0 // pred_fallthru
    _
  // Predicated region
  $region34: #{knowledge_editor_forward.1} parent=0 // pred_check
    _
  $region35: #{knowledge_editor_forward.1} parent=0 // pred_check_branch
    %31 = sbr.rel (0) target = $region37
  $region36: #{knowledge_editor_forward.1} parent=0 // pred_region
    _
  $region37: #{knowledge_editor_forward.1} parent=0 // pred_fallthru
    _
  %v32 = vld [vmem:[%s0] sm:$0xff]
  %v33 = vld [vmem:[%s0 + $0x8] sm:$0xff]
  %v34 = vld [vmem:[%s0 + $0x10] sm:$0xff]
  %v35 = vld [vmem:[%s2] sm:$0xff]
  %v36 = vld [vmem:[%s2 + $0x8] sm:$0xff]
  %v37 = vld [vmem:[%s2 + $0x10] sm:$0xff]
  %v38 = vld [vmem:[%s2 + $0x18] sm:$0xff]
  %v39 = vld [vmem:[%s3] sm:$0x1]
  %v41 = vperm.slane %v39, 0
  %vm43 = vcmask 261120
  %v45 = vsel %vm43, %v32, 0
  %v48 = vsel %vm43, %v33, 0
  %v51 = vsel %vm43, %v34, 0
  %53 = vmatpush.msra.mxu0 0.0
  %54 = vmatpush.msra.mxu0 0.0
  %55 = vmatpush.msra.mxu0 0.0
  %56 = vmatpush.msra.mxu0 0.0
  %57 = vmatpush.msra.mxu0 0.0
  %58 = vmatpush.msra.mxu0 0.0
  %59 = vmatpush.msra.mxu0 0.0
  %60 = vmatpush.msra.mxu0 0.0
  %61 = vmatpush.msra.mxu0 0.0
  %62 = vmatpush.msra.mxu0 0.0
  %63 = vmatpush.msra.mxu0 0.0
  %64 = vmatpush.msra.mxu0 0.0
  %65 = vmatpush.msra.mxu0 %v38
  %66 = vmatpush.msra.mxu0 %v37
  %67 = vmatpush.msra.mxu0 %v36
  %68 = vmatpush.msra.mxu0 %v35
  %69 = vmatmul.f32.gmra.mxu0 %v45
  %v70 = vpop.f32.mrf.mxu0
  %v71 = vadd.f32 %v41, %v70
  %72 = vmatmul.f32.gmra.mxu0 %v48
  %v73 = vpop.f32.mrf.mxu0
  %v74 = vadd.f32 %v41, %v73
  %75 = vmatmul.f32.gmra.mxu0 %v51
  %v76 = vpop.f32.mrf.mxu0
  %v77 = vadd.f32 %v41, %v76
  %78 = vdwg.mxu0
  %v79 = vtanh.pop %v71
  %v80 = vtanh.pop %v74
  %v81 = vtanh.pop %v77
  %v82 = vld [vmem:[%s1] sm:$0x3]
  %vm83 = vcmask 195584
  %v85 = vsel %vm83, %v82, 0
  %87 = vmatpush.msra.mxu0 0.0
  %88 = vmatpush.msra.mxu0 0.0
  %89 = vmatpush.msra.mxu0 0.0
  %90 = vmatpush.msra.mxu0 0.0
  %91 = vmatpush.msra.mxu0 0.0
  %92 = vmatpush.msra.mxu0 0.0
  %93 = vmatpush.msra.mxu0 0.0
  %94 = vmatpush.msra.mxu0 0.0
  %95 = vmatpush.msra.mxu0 0.0
  %96 = vmatpush.msra.mxu0 0.0
  %97 = vmatpush.msra.mxu0 0.0
  %98 = vmatpush.msra.mxu0 0.0
  %99 = vmatpush.msra.mxu0 0.0
  %100 = vmatpush.msra.mxu0 %v81
  %101 = vmatpush.msra.mxu0 %v80
  %102 = vmatpush.msra.mxu0 %v79
  %103 = vmatmul.f32.gmra.mxu0 %v85
  %v104 = vpop.f32.mrf.mxu0
  %v105 = vadd.f32 0.0, %v104
  %106 = vdwg.mxu0
  %v107 = vld [vmem:[%s4] sm:$0xff]
  %v108 = vld [vmem:[%s4 + $0x8] sm:$0xff]
  %v109 = vld [vmem:[%s4 + $0x10] sm:$0xff]
  %v110 = vld [vmem:[%s4 + $0x18] sm:$0xff]
  %v111 = vld [vmem:[%s5] sm:$0x1]
  %v113 = vperm.slane %v111, 0
  %v116 = vsel %vm43, %v105, 0
  %118 = vmatpush.msra.mxu0 0.0
  %119 = vmatpush.msra.mxu0 0.0
  %120 = vmatpush.msra.mxu0 0.0
  %121 = vmatpush.msra.mxu0 0.0
  %122 = vmatpush.msra.mxu0 0.0
  %123 = vmatpush.msra.mxu0 0.0
  %124 = vmatpush.msra.mxu0 0.0
  %125 = vmatpush.msra.mxu0 0.0
  %126 = vmatpush.msra.mxu0 0.0
  %127 = vmatpush.msra.mxu0 0.0
  %128 = vmatpush.msra.mxu0 0.0
  %129 = vmatpush.msra.mxu0 0.0
  %130 = vmatpush.msra.mxu0 %v110
  %131 = vmatpush.msra.mxu0 %v109
  %132 = vmatpush.msra.mxu0 %v108
  %133 = vmatpush.msra.mxu0 %v107
  %134 = vmatmul.f32.gmra.mxu0 %v116
  %v135 = vpop.f32.mrf.mxu0
  %v136 = vadd.f32 %v113, %v135
  %137 = vdwg.mxu0
  %v138 = vld [vmem:[%s6] sm:$0xff]
  %v139 = vld [vmem:[%s6 + $0x8] sm:$0xff]
  %v140 = vld [vmem:[%s6 + $0x10] sm:$0xff]
  %v141 = vld [vmem:[%s6 + $0x18] sm:$0xff]
  %v142 = vld [vmem:[%s6 + $0x20] sm:$0xff]
  %v143 = vld [vmem:[%s6 + $0x28] sm:$0xff]
  %v144 = vld [vmem:[%s6 + $0x30] sm:$0xff]
  %v145 = vld [vmem:[%s6 + $0x38] sm:$0xff]
  %v146 = vld [vmem:[%s6 + $0x40] sm:$0xff]
  %v147 = vld [vmem:[%s6 + $0x48] sm:$0xff]
  %v148 = vld [vmem:[%s6 + $0x50] sm:$0xff]
  %v149 = vld [vmem:[%s6 + $0x58] sm:$0xff]
  %v150 = vld [vmem:[%s6 + $0x60] sm:$0xff]
  %v151 = vld [vmem:[%s6 + $0x68] sm:$0xff]
  %v152 = vld [vmem:[%s6 + $0x70] sm:$0xff]
  %v153 = vld [vmem:[%s6 + $0x78] sm:$0xff]
  %v154 = vld [vmem:[%s7] sm:$0xf]
  %v156 = vperm.slane %v154, 0
  %v157 = vperm.slane %v154, 1
  %v158 = vperm.slane %v154, 2
  %v159 = vperm.slane %v154, 3
  %164 = vmatpush.msra.mxu0 0.0
  %165 = vmatpush.msra.mxu0 0.0
  %166 = vmatpush.msra.mxu0 0.0
  %167 = vmatpush.msra.mxu0 0.0
  %168 = vmatpush.msra.mxu0 0.0
  %169 = vmatpush.msra.mxu0 0.0
  %170 = vmatpush.msra.mxu0 0.0
  %171 = vmatpush.msra.mxu0 0.0
  %172 = vmatpush.msra.mxu0 0.0
  %173 = vmatpush.msra.mxu0 0.0
  %174 = vmatpush.msra.mxu0 0.0
  %175 = vmatpush.msra.mxu0 0.0
  %176 = vmatpush.msra.mxu0 %v150
  %177 = vmatpush.msra.mxu0 %v146
  %178 = vmatpush.msra.mxu0 %v142
  %179 = vmatpush.msra.mxu0 %v138
  %180 = vmatmul.f32.gmra.mxu0 %v116
  %v181 = vpop.f32.mrf.mxu0
  %v182 = vadd.f32 %v156, %v181
  %183 = vdwg.mxu0
  %184 = vmatpush.msra.mxu0 0.0
  %185 = vmatpush.msra.mxu0 0.0
  %186 = vmatpush.msra.mxu0 0.0
  %187 = vmatpush.msra.mxu0 0.0
  %188 = vmatpush.msra.mxu0 0.0
  %189 = vmatpush.msra.mxu0 0.0
  %190 = vmatpush.msra.mxu0 0.0
  %191 = vmatpush.msra.mxu0 0.0
  %192 = vmatpush.msra.mxu0 0.0
  %193 = vmatpush.msra.mxu0 0.0
  %194 = vmatpush.msra.mxu0 0.0
  %195 = vmatpush.msra.mxu0 0.0
  %196 = vmatpush.msra.mxu0 %v151
  %197 = vmatpush.msra.mxu0 %v147
  %198 = vmatpush.msra.mxu0 %v143
  %199 = vmatpush.msra.mxu0 %v139
  %200 = vmatmul.f32.gmra.mxu0 %v116
  %v201 = vpop.f32.mrf.mxu0
  %v202 = vadd.f32 %v157, %v201
  %203 = vdwg.mxu0
  %204 = vmatpush.msra.mxu0 0.0
  %205 = vmatpush.msra.mxu0 0.0
  %206 = vmatpush.msra.mxu0 0.0
  %207 = vmatpush.msra.mxu0 0.0
  %208 = vmatpush.msra.mxu0 0.0
  %209 = vmatpush.msra.mxu0 0.0
  %210 = vmatpush.msra.mxu0 0.0
  %211 = vmatpush.msra.mxu0 0.0
  %212 = vmatpush.msra.mxu0 0.0
  %213 = vmatpush.msra.mxu0 0.0
  %214 = vmatpush.msra.mxu0 0.0
  %215 = vmatpush.msra.mxu0 0.0
  %216 = vmatpush.msra.mxu0 %v152
  %217 = vmatpush.msra.mxu0 %v148
  %218 = vmatpush.msra.mxu0 %v144
  %219 = vmatpush.msra.mxu0 %v140
  %220 = vmatmul.f32.gmra.mxu0 %v116
  %v221 = vpop.f32.mrf.mxu0
  %v222 = vadd.f32 %v158, %v221
  %223 = vdwg.mxu0
  %224 = vmatpush.msra.mxu0 0.0
  %225 = vmatpush.msra.mxu0 0.0
  %226 = vmatpush.msra.mxu0 0.0
  %227 = vmatpush.msra.mxu0 0.0
  %228 = vmatpush.msra.mxu0 0.0
  %229 = vmatpush.msra.mxu0 0.0
  %230 = vmatpush.msra.mxu0 0.0
  %231 = vmatpush.msra.mxu0 0.0
  %232 = vmatpush.msra.mxu0 0.0
  %233 = vmatpush.msra.mxu0 0.0
  %234 = vmatpush.msra.mxu0 0.0
  %235 = vmatpush.msra.mxu0 0.0
  %236 = vmatpush.msra.mxu0 %v153
  %237 = vmatpush.msra.mxu0 %v149
  %238 = vmatpush.msra.mxu0 %v145
  %239 = vmatpush.msra.mxu0 %v141
  %240 = vmatmul.f32.gmra.mxu0 %v116
  %v241 = vpop.f32.mrf.mxu0
  %v242 = vadd.f32 %v159, %v241
  %243 = vdwg.mxu0
  %v244 = vxor.u32 %v136, 2147483648
  %v245 = vmul.f32 %v244, 1.442695
  %v246 = vpow.pop %v245
  %v247 = vadd.f32 %v246, 1.0
  %v248 = vrcp.pop %v247
  %v249 = vmul.f32 %v247, %v248
  %v250 = vsub.f32 1.0, %v249
  %v251 = vmul.f32 %v248, %v250
  %v252 = vadd.f32 %v248, %v251
  %vm253 = vweird.f32 %v247
  %vm254 = vweird.f32 %v248
  %vm255 = vmor %vm253, %vm254
  %v256 = vsel %vm255, %v248, %v252
  %v257 = vand.u32 2147483647, %v247
  %vm258 = vcmp.eq.f32.partialorder %v257, 8.507059e+37
  %v259 = vand.u32 %v247, 2147483648
  %v260 = vor.u32 1.1754944e-38, %v259
  %v261 = vsel %vm258, %v260, %v256
  %v262 = vmul.f32 1.0, %v261
  %264 = vset.pattern.permute.xlu0 64
  %265 = vperm.xlu0 %264, %v262
  %v266 = vpop.permute.xlu0 %265
  %v268 = vmul.f32 %v266, %v182
  %v269 = vmul.f32 %v266, %v202
  %270 = vxpose.xlu0.b32.start [1/16] %v136, 128
  %271 = vxpose.xlu0.b32.cont [2/16] 0.0, 128
  %272 = vxpose.xlu0.b32.cont [3/16] 0.0, 128
  %273 = vxpose.xlu0.b32.cont [4/16] 0.0, 128
  %274 = vxpose.xlu0.b32.cont [5/16] 0.0, 128
  %275 = vxpose.xlu0.b32.cont [6/16] 0.0, 128
  %276 = vxpose.xlu0.b32.cont [7/16] 0.0, 128
  %277 = vxpose.xlu0.b32.cont [8/16] 0.0, 128
  %278 = vxpose.xlu0.b32.cont [9/16] 0.0, 128
  %279 = vxpose.xlu0.b32.cont [10/16] 0.0, 128
  %280 = vxpose.xlu0.b32.cont [11/16] 0.0, 128
  %281 = vxpose.xlu0.b32.cont [12/16] 0.0, 128
  %282 = vxpose.xlu0.b32.cont [13/16] 0.0, 128
  %283 = vxpose.xlu0.b32.cont [14/16] 0.0, 128
  %284 = vxpose.xlu0.b32.cont [15/16] 0.0, 128
  %285 = vxpose.xlu0.b32.end [16/16] 0.0, 128
  %v286 = vpop.trf.xlu0
  %v287 = vpop.trf.xlu0
  %v288 = vpop.trf.xlu0
  %v289 = vpop.trf.xlu0
  %v290 = vpop.trf.xlu0
  %v291 = vpop.trf.xlu0
  %v292 = vpop.trf.xlu0
  %v293 = vpop.trf.xlu0
  %v294 = vpop.trf.xlu0
  %v295 = vpop.trf.xlu0
  %v296 = vpop.trf.xlu0
  %v297 = vpop.trf.xlu0
  %v298 = vpop.trf.xlu0
  %v299 = vpop.trf.xlu0
  %v300 = vpop.trf.xlu0
  %v301 = vpop.trf.xlu0
  %vm302 = vcmask 15360
  %v304 = vsel %vm302, %v286, 0
  %v307 = vsel %vm302, %v287, 0
  %v310 = vsel %vm302, %v288, 0
  %v313 = vsel %vm302, %v289, 0
  %vm315 = vcmask 1041408
  %v317 = vsel %vm315, %v268, 0
  %319 = vmatpush.msra.mxu0 0.0
  %320 = vmatpush.msra.mxu0 0.0
  %321 = vmatpush.msra.mxu0 0.0
  %322 = vmatpush.msra.mxu0 0.0
  %323 = vmatpush.msra.mxu0 0.0
  %324 = vmatpush.msra.mxu0 0.0
  %325 = vmatpush.msra.mxu0 0.0
  %326 = vmatpush.msra.mxu0 0.0
  %327 = vmatpush.msra.mxu0 0.0
  %328 = vmatpush.msra.mxu0 0.0
  %329 = vmatpush.msra.mxu0 0.0
  %330 = vmatpush.msra.mxu0 0.0
  %331 = vmatpush.msra.mxu0 0.0
  %332 = vmatpush.msra.mxu0 0.0
  %333 = vmatpush.msra.mxu0 0.0
  %334 = vmatpush.msra.mxu0 %v317
  %335 = vmatmul.f32.gmra.mxu0 %v304
  %v336 = vpop.f32.mrf.mxu0
  %v337 = vadd.f32 0.0, %v336
  %338 = vmatmul.f32.gmra.mxu0 %v307
  %v339 = vpop.f32.mrf.mxu0
  %v340 = vadd.f32 0.0, %v339
  %341 = vmatmul.f32.gmra.mxu0 %v310
  %v342 = vpop.f32.mrf.mxu0
  %v343 = vadd.f32 0.0, %v342
  %344 = vmatmul.f32.gmra.mxu0 %v313
  %v345 = vpop.f32.mrf.mxu0
  %v346 = vadd.f32 0.0, %v345
  %347 = vdwg.mxu0
  %349 = vrot.lane.b32.xlu0 %v136, 96
  %v350 = vpop.permute.xlu0 %349
  %352 = vxpose.xlu0.b32.start [1/16] %v350, 128
  %353 = vxpose.xlu0.b32.cont [2/16] 0.0, 128
  %354 = vxpose.xlu0.b32.cont [3/16] 0.0, 128
  %355 = vxpose.xlu0.b32.cont [4/16] 0.0, 128
  %356 = vxpose.xlu0.b32.cont [5/16] 0.0, 128
  %357 = vxpose.xlu0.b32.cont [6/16] 0.0, 128
  %358 = vxpose.xlu0.b32.cont [7/16] 0.0, 128
  %359 = vxpose.xlu0.b32.cont [8/16] 0.0, 128
  %360 = vxpose.xlu0.b32.cont [9/16] 0.0, 128
  %361 = vxpose.xlu0.b32.cont [10/16] 0.0, 128
  %362 = vxpose.xlu0.b32.cont [11/16] 0.0, 128
  %363 = vxpose.xlu0.b32.cont [12/16] 0.0, 128
  %364 = vxpose.xlu0.b32.cont [13/16] 0.0, 128
  %365 = vxpose.xlu0.b32.cont [14/16] 0.0, 128
  %366 = vxpose.xlu0.b32.cont [15/16] 0.0, 128
  %367 = vxpose.xlu0.b32.end [16/16] 0.0, 128
  %v368 = vpop.trf.xlu0
  %v369 = vpop.trf.xlu0
  %v370 = vpop.trf.xlu0
  %v371 = vpop.trf.xlu0
  %v372 = vpop.trf.xlu0
  %v373 = vpop.trf.xlu0
  %v374 = vpop.trf.xlu0
  %v375 = vpop.trf.xlu0
  %v376 = vpop.trf.xlu0
  %v377 = vpop.trf.xlu0
  %v378 = vpop.trf.xlu0
  %v379 = vpop.trf.xlu0
  %v380 = vpop.trf.xlu0
  %v381 = vpop.trf.xlu0
  %v382 = vpop.trf.xlu0
  %v383 = vpop.trf.xlu0
  %v385 = vsel %vm302, %v368, 0
  %v388 = vsel %vm302, %v369, 0
  %v391 = vsel %vm302, %v370, 0
  %v394 = vsel %vm302, %v371, 0
  %v397 = vsel %vm315, %v269, 0
  %399 = vmatpush.msra.mxu0 0.0
  %400 = vmatpush.msra.mxu0 0.0
  %401 = vmatpush.msra.mxu0 0.0
  %402 = vmatpush.msra.mxu0 0.0
  %403 = vmatpush.msra.mxu0 0.0
  %404 = vmatpush.msra.mxu0 0.0
  %405 = vmatpush.msra.mxu0 0.0
  %406 = vmatpush.msra.mxu0 0.0
  %407 = vmatpush.msra.mxu0 0.0
  %408 = vmatpush.msra.mxu0 0.0
  %409 = vmatpush.msra.mxu0 0.0
  %410 = vmatpush.msra.mxu0 0.0
  %411 = vmatpush.msra.mxu0 0.0
  %412 = vmatpush.msra.mxu0 0.0
  %413 = vmatpush.msra.mxu0 0.0
  %414 = vmatpush.msra.mxu0 %v397
  %415 = vmatmul.f32.gmra.mxu0 %v385
  %v416 = vpop.f32.mrf.mxu0
  %v417 = vadd.f32 0.0, %v416
  %418 = vmatmul.f32.gmra.mxu0 %v388
  %v419 = vpop.f32.mrf.mxu0
  %v420 = vadd.f32 0.0, %v419
  %421 = vmatmul.f32.gmra.mxu0 %v391
  %v422 = vpop.f32.mrf.mxu0
  %v423 = vadd.f32 0.0, %v422
  %424 = vmatmul.f32.gmra.mxu0 %v394
  %v425 = vpop.f32.mrf.mxu0
  %v426 = vadd.f32 0.0, %v425
  %427 = vdwg.mxu0
  %v428 = vld [vmem:[%s8] sm:$0xff]
  %v429 = vld [vmem:[%s8 + $0x8] sm:$0xff]
  %v430 = vld [vmem:[%s8 + $0x10] sm:$0xff]
  %v431 = vld [vmem:[%s8 + $0x18] sm:$0xff]
  %v432 = vmul.f32 %v337, %v428
  %v433 = vmul.f32 %v340, %v429
  %v434 = vmul.f32 %v343, %v430
  %v435 = vmul.f32 %v346, %v431
  %v436 = vadd.f32 %v432, %v417
  %v437 = vadd.f32 %v433, %v420
  %v438 = vadd.f32 %v434, %v423
  %v439 = vadd.f32 %v435, %v426
  %440 = vst [vmem:[%s9] sm:$0xff] %v436
  %441 = vst [vmem:[%s9 + $0x8] sm:$0xff] %v437
  %442 = vst [vmem:[%s9 + $0x10] sm:$0xff] %v438
  %443 = vst [vmem:[%s9 + $0x18] sm:$0xff] %v439
  %444 = vset.pattern.permute.xlu0 88
  %445 = vperm.xlu0 %444, %v262
  %v446 = vpop.permute.xlu0 %445
  %v448 = vmul.f32 %v446, %v222
  %v449 = vmul.f32 %v446, %v242
  %450 = vrot.lane.b32.xlu0 %v136, 56
  %v451 = vpop.permute.xlu0 %450
  %453 = vxpose.xlu0.b32.start [1/16] %v451, 128
  %454 = vxpose.xlu0.b32.cont [2/16] 0.0, 128
  %455 = vxpose.xlu0.b32.cont [3/16] 0.0, 128
  %456 = vxpose.xlu0.b32.cont [4/16] 0.0, 128
  %457 = vxpose.xlu0.b32.cont [5/16] 0.0, 128
  %458 = vxpose.xlu0.b32.cont [6/16] 0.0, 128
  %459 = vxpose.xlu0.b32.cont [7/16] 0.0, 128
  %460 = vxpose.xlu0.b32.cont [8/16] 0.0, 128
  %461 = vxpose.xlu0.b32.cont [9/16] 0.0, 128
  %462 = vxpose.xlu0.b32.cont [10/16] 0.0, 128
  %463 = vxpose.xlu0.b32.cont [11/16] 0.0, 128
  %464 = vxpose.xlu0.b32.cont [12/16] 0.0, 128
  %465 = vxpose.xlu0.b32.cont [13/16] 0.0, 128
  %466 = vxpose.xlu0.b32.cont [14/16] 0.0, 128
  %467 = vxpose.xlu0.b32.cont [15/16] 0.0, 128
  %468 = vxpose.xlu0.b32.end [16/16] 0.0, 128
  %v469 = vpop.trf.xlu0
  %v470 = vpop.trf.xlu0
  %v471 = vpop.trf.xlu0
  %v472 = vpop.trf.xlu0
  %v473 = vpop.trf.xlu0
  %v474 = vpop.trf.xlu0
  %v475 = vpop.trf.xlu0
  %v476 = vpop.trf.xlu0
  %v477 = vpop.trf.xlu0
  %v478 = vpop.trf.xlu0
  %v479 = vpop.trf.xlu0
  %v480 = vpop.trf.xlu0
  %v481 = vpop.trf.xlu0
  %v482 = vpop.trf.xlu0
  %v483 = vpop.trf.xlu0
  %v484 = vpop.trf.xlu0
  %v486 = vsel %vm302, %v469, 0
  %v489 = vsel %vm315, %v448, 0
  %491 = vmatpush.msra.mxu0 0.0
  %492 = vmatpush.msra.mxu0 0.0
  %493 = vmatpush.msra.mxu0 0.0
  %494 = vmatpush.msra.mxu0 0.0
  %495 = vmatpush.msra.mxu0 0.0
  %496 = vmatpush.msra.mxu0 0.0
  %497 = vmatpush.msra.mxu0 0.0
  %498 = vmatpush.msra.mxu0 0.0
  %499 = vmatpush.msra.mxu0 0.0
  %500 = vmatpush.msra.mxu0 0.0
  %501 = vmatpush.msra.mxu0 0.0
  %502 = vmatpush.msra.mxu0 0.0
  %503 = vmatpush.msra.mxu0 0.0
  %504 = vmatpush.msra.mxu0 0.0
  %505 = vmatpush.msra.mxu0 0.0
  %506 = vmatpush.msra.mxu0 %v489
  %507 = vmatmul.f32.gmra.mxu0 %v486
  %v508 = vpop.f32.mrf.mxu0
  %v509 = vadd.f32 0.0, %v508
  %510 = vdwg.mxu0
  %511 = vrot.lane.b32.xlu0 %v136, 48
  %v512 = vpop.permute.xlu0 %511
  %514 = vxpose.xlu0.b32.start [1/16] %v512, 128
  %515 = vxpose.xlu0.b32.cont [2/16] 0.0, 128
  %516 = vxpose.xlu0.b32.cont [3/16] 0.0, 128
  %517 = vxpose.xlu0.b32.cont [4/16] 0.0, 128
  %518 = vxpose.xlu0.b32.cont [5/16] 0.0, 128
  %519 = vxpose.xlu0.b32.cont [6/16] 0.0, 128
  %520 = vxpose.xlu0.b32.cont [7/16] 0.0, 128
  %521 = vxpose.xlu0.b32.cont [8/16] 0.0, 128
  %522 = vxpose.xlu0.b32.cont [9/16] 0.0, 128
  %523 = vxpose.xlu0.b32.cont [10/16] 0.0, 128
  %524 = vxpose.xlu0.b32.cont [11/16] 0.0, 128
  %525 = vxpose.xlu0.b32.cont [12/16] 0.0, 128
  %526 = vxpose.xlu0.b32.cont [13/16] 0.0, 128
  %527 = vxpose.xlu0.b32.cont [14/16] 0.0, 128
  %528 = vxpose.xlu0.b32.cont [15/16] 0.0, 128
  %529 = vxpose.xlu0.b32.end [16/16] 0.0, 128
  %v530 = vpop.trf.xlu0
  %v531 = vpop.trf.xlu0
  %v532 = vpop.trf.xlu0
  %v533 = vpop.trf.xlu0
  %v534 = vpop.trf.xlu0
  %v535 = vpop.trf.xlu0
  %v536 = vpop.trf.xlu0
  %v537 = vpop.trf.xlu0
  %v538 = vpop.trf.xlu0
  %v539 = vpop.trf.xlu0
  %v540 = vpop.trf.xlu0
  %v541 = vpop.trf.xlu0
  %v542 = vpop.trf.xlu0
  %v543 = vpop.trf.xlu0
  %v544 = vpop.trf.xlu0
  %v545 = vpop.trf.xlu0
  %v547 = vsel %vm302, %v530, 0
  %v550 = vsel %vm315, %v449, 0
  %552 = vmatpush.msra.mxu0 0.0
  %553 = vmatpush.msra.mxu0 0.0
  %554 = vmatpush.msra.mxu0 0.0
  %555 = vmatpush.msra.mxu0 0.0
  %556 = vmatpush.msra.mxu0 0.0
  %557 = vmatpush.msra.mxu0 0.0
  %558 = vmatpush.msra.mxu0 0.0
  %559 = vmatpush.msra.mxu0 0.0
  %560 = vmatpush.msra.mxu0 0.0
  %561 = vmatpush.msra.mxu0 0.0
  %562 = vmatpush.msra.mxu0 0.0
  %563 = vmatpush.msra.mxu0 0.0
  %564 = vmatpush.msra.mxu0 0.0
  %565 = vmatpush.msra.mxu0 0.0
  %566 = vmatpush.msra.mxu0 0.0
  %567 = vmatpush.msra.mxu0 %v550
  %568 = vmatmul.f32.gmra.mxu0 %v547
  %v569 = vpop.f32.mrf.mxu0
  %v570 = vadd.f32 0.0, %v569
  %571 = vdwg.mxu0
  %v572 = vld [vmem:[%s8 + $0x20] sm:$0xff]
  %v573 = vmul.f32 %v509, %v572
  %v574 = vadd.f32 %v573, %v570
  %575 = vst [vmem:[%s9 + $0x20] sm:$0xff] %v574
  // Predicated region
  $region38: #{knowledge_editor_forward.1} parent=0 // pred_check
    _
  $region39: #{knowledge_editor_forward.1} parent=0 // pred_check_branch
    %577 = sbr.rel (0) target = $region41
  $region40: #{knowledge_editor_forward.1} parent=0 // pred_region
    _
  $region41: #{knowledge_editor_forward.1} parent=0 // pred_fallthru
    _
  // Predicated region
  $region42: #{knowledge_editor_forward.1} parent=0 // pred_check
    _
  $region43: #{knowledge_editor_forward.1} parent=0 // pred_check_branch
    %579 = sbr.rel (0) target = $region45
  $region44: #{knowledge_editor_forward.1} parent=0 // pred_region
    _
  $region45: #{knowledge_editor_forward.1} parent=0 // pred_fallthru
    _

</llo_original>
